<compile_context>
chip_gen: v7x
topology: tpu7x:2x2x1
jax: 0.10.0
libtpu: 0.0.40
codegen_flags: <defaults>
</compile_context>

<pallas_src>
import jax
import jax.numpy as jnp
from jax import lax
from jax.experimental import pallas as pl
from jax.experimental.pallas import tpu as pltpu


# ----------------------------------------------------------------------------
# sizing helpers
# ----------------------------------------------------------------------------
def _vmem_budget_and_limit():
    """Per-generation VMEM sizing (flat 12 MiB budget left v5e/v6e idle)."""
    cap = None
    try:
        cap = getattr(pltpu.get_tpu_info(), "vmem_capacity_bytes", None)
    except Exception:
        cap = None
    if not cap:
        cap = 64 * 1024 * 1024            # conservative: v7x per-core VMEM
    #   v5e/v6e (128 MiB) -> 48 MiB block budget / 64 MiB scoped limit
    #   v7x     ( 64 MiB) -> 24 MiB block budget / 32 MiB scoped limit
    budget = min((3 * cap) // 8, 48 * 1024 * 1024)
    limit = min(cap // 2, 64 * 1024 * 1024)
    return budget, limit


def _tw_cap(itemsize):
    # Conservative MXU:HBM ridge cap on the contraction tile, valid across
    # v5e/v6e/v7x (bf16 ridge ~256 on v7x/v5e, f32 ridge ~128), so the
    # replication matmul stays hidden under the HBM store on every generation.
    return 256 if itemsize < 4 else 128


def _aligned_divisor(n, cap):
    """Largest multiple-of-128 divisor of n that is <= cap (None if none)."""
    best, d = None, 128
    while d <= min(cap, n):
        if n % d == 0:
            best = d
        d += 128
    return best


# ----------------------------------------------------------------------------
# in-kernel column replication
# ----------------------------------------------------------------------------
def _replication_matrix(tw, two, x_scale, dtype):
    # S[k, c] = 1  iff  c // x_scale == k.  Built in-kernel: no HBM fetch, no
    # resident VMEM buffer; pure VPU work hidden under the output DMA.
    row = lax.broadcasted_iota(jnp.int32, (tw, two), 0)
    col = lax.broadcasted_iota(jnp.int32, (tw, two), 1)
    keep = (col >= row * x_scale) & (col < row * x_scale + x_scale)
    return keep.astype(dtype)


def _colrep(x, x_scale, out_dtype, prec):
    """Column (lane-axis) nearest-neighbor replication of a (tm, tw) tile."""
    if x_scale == 1:
        return x
    tw = x.shape[-1]
    s = _replication_matrix(tw, tw * x_scale, x_scale, x.dtype)
    return jnp.dot(x, s, precision=prec,
                   preferred_element_type=jnp.float32).astype(out_dtype)


# ----------------------------------------------------------------------------
# kernels
# ----------------------------------------------------------------------------
def _make_flat_kernel(x_scale, y_scale, w_out, prec):
    """TW == W: one grid step writes the full (TM, y_scale*Wo) output slab."""

    def kernel(x_ref, o_ref):
        up = _colrep(x_ref[...], x_scale, o_ref.dtype, prec)
        if y_scale == 1:
            o_ref[...] = up
        else:
            # o_ref is (TM, y_scale * w_out): flat layout -> the HBM DMA is one
            # contiguous lane-dense slab per row; replicas are static slices.
            for r in range(y_scale):
                o_ref[:, r * w_out:(r + 1) * w_out] = up

    return kernel


def _make_tiled_kernel(x_scale, y_scale, tw, w_full, mask_cols, prec):
    """TW < W: W is tiled; if y_scale > 1 an inner r axis re-stores the tile."""

    def load_x(x_ref):
        xv = x_ref[...]
        if mask_cols:
            # cdiv edge tile: zero the padding columns so garbage * 0 cannot
            # produce NaN/Inf in in-bounds outputs.
            col = lax.broadcasted_iota(jnp.int32, xv.shape, 1)
            valid = col + pl.program_id(1) * tw < w_full
            xv = jnp.where(valid, xv, jnp.zeros_like(xv))
        return xv

    if y_scale == 1:
        def kernel(x_ref, o_ref):
            o_ref[...] = _colrep(load_x(x_ref), x_scale, o_ref.dtype, prec)
    else:
        def kernel(x_ref, o_ref, tmp_ref):
            r = pl.program_id(2)

            @pl.when(r == 0)
            def _():
                up = _colrep(load_x(x_ref), x_scale, o_ref.dtype, prec)
                tmp_ref[...] = up      # keep for the remaining replicas
                o_ref[...] = up        # same vregs: no tmp read-back at r == 0

            @pl.when(r > 0)
            def _():
                o_ref[...] = tmp_ref[...]

    return kernel


# ----------------------------------------------------------------------------
# wrapper
# ----------------------------------------------------------------------------
def stretch2d(x, *, x_scale, y_scale, mode="nearest"):
    """Pallas equivalent of Stretch2d.forward for NCHW input."""
    assert mode == "nearest", "only 'nearest' mode is implemented"
    assert int(x_scale) == x_scale and int(y_scale) == y_scale, (
        "integer scale factors only (matches Stretch2d usage)")
    x_scale, y_scale = int(x_scale), int(y_scale)
    assert x_scale >= 1 and y_scale >= 1
    assert jnp.issubdtype(x.dtype, jnp.floating), "float inputs only"

    N, C, H, W = x.shape
    Ho, Wo = H * y_scale, W * x_scale
    M = N * C * H
    itemsize = jnp.dtype(x.dtype).itemsize
    sub = 16 if itemsize < 4 else 8       # sublane alignment (bf16 packs 2/row)
    # f32 exactness of the 0/1 replication matmul requires the multi-pass MXU
    # path; bf16 is exact with the native single pass.
    prec = lax.Precision.HIGHEST if x.dtype == jnp.float32 else None

    budget, vmem_limit = _vmem_budget_and_limit()

    # ---- column (lane) tiling ----------------------------------------------
    cap = _tw_cap(itemsize)
    if x_scale == 1 or W <= cap:
        TW = W                                 # flat path: full row per step
    else:
        TW = _aligned_divisor(W, cap) or cap   # else cdiv grid + masked edge
    TWo = TW * x_scale
    flat = TW == W
    mask_cols = (W % TW) != 0

    # ---- row (M = N*C*H) tiling --------------------------------------------
    out_cols = y_scale * Wo if flat else TWo
    tmp_cols = TWo if (not flat and y_scale > 1) else 0
    row_bytes = itemsize * (2 * TW + 2 * out_cols + TWo + tmp_cols)
    fixed_bytes = 2 * TW * TWo * itemsize      # in-kernel S temp + slack
    tm_cap = max(sub, (budget - fixed_bytes) // max(row_bytes, 1))
    tm_cap = min(tm_cap, 4096)
    TM = (tm_cap // 256) * 256 if tm_cap >= 256 else (tm_cap // sub) * sub
    TM = max(sub, min(TM, pl.cdiv(M, sub) * sub))
    gm = pl.cdiv(M, TM)
    gw = pl.cdiv(W, TW)

    xf = x.reshape(M, W)                       # metadata-only reshape

    if flat:
        # One grid step per M tile; output block is a flat lane-dense slab.
        out = pl.pallas_call(
            _make_flat_kernel(x_scale, y_scale, Wo, prec),
            out_shape=jax.ShapeDtypeStruct((M, y_scale * Wo), x.dtype),
            grid=(gm,),
            in_specs=[pl.BlockSpec((TM, W), lambda i: (i, 0))],
            out_specs=pl.BlockSpec((TM, y_scale * Wo), lambda i: (i, 0)),
            compiler_params=pltpu.CompilerParams(
                dimension_semantics=("parallel",),
                vmem_limit_bytes=vmem_limit),
        )(xf)
    elif y_scale == 1:
        out = pl.pallas_call(
            _make_tiled_kernel(x_scale, 1, TW, W, mask_cols, prec),
            out_shape=jax.ShapeDtypeStruct((M, Wo), x.dtype),
            grid=(gm, gw),
            in_specs=[pl.BlockSpec((TM, TW), lambda i, j: (i, j))],
            out_specs=pl.BlockSpec((TM, TWo), lambda i, j: (i, j)),
            compiler_params=pltpu.CompilerParams(
                dimension_semantics=("parallel", "parallel"),
                vmem_limit_bytes=vmem_limit),
        )(xf)
    else:
        # Tiled W with row replicas: keep r innermost (scratch dependency),
        # but r == 0 stores directly from the matmul result.
        out = pl.pallas_call(
            _make_tiled_kernel(x_scale, y_scale, TW, W, mask_cols, prec),
            out_shape=jax.ShapeDtypeStruct((M, y_scale, Wo), x.dtype),
            grid=(gm, gw, y_scale),
            in_specs=[pl.BlockSpec((TM, TW), lambda i, j, r: (i, j))],
            out_specs=pl.BlockSpec((TM, None, TWo), lambda i, j, r: (i, r, j)),
            scratch_shapes=[pltpu.VMEM((TM, TWo), x.dtype)],
            compiler_params=pltpu.CompilerParams(
                dimension_semantics=("parallel", "parallel", "arbitrary"),
                vmem_limit_bytes=vmem_limit),
        )(xf)

    # Output layouts above are bit-identical to NCHW output: free reshape.
    return out.reshape(N, C, Ho, Wo)


# ----------------------------------------------------------------------------
# self-test
# ----------------------------------------------------------------------------
if __name__ == "__main__":
    key = jax.random.PRNGKey(0)

    def _ref(x, ys, xs):
        return jnp.repeat(jnp.repeat(x, ys, axis=2), xs, axis=3)

    def _check(x, xs, ys, name):
        y = stretch2d(x, x_scale=xs, y_scale=ys)
        jax.block_until_ready(y)
        r = _ref(x, ys, xs)
        assert y.shape == r.shape, (name, y.shape, r.shape)
        assert y.dtype == x.dtype, (name, y.dtype)
        assert jnp.allclose(y.astype(jnp.float32), r.astype(jnp.float32)), (
            f"{name}: mismatch vs reference nearest upsample")

    k1, k2, k3, k4 = jax.random.split(key, 4)

    # 1) f32, both scales > 1, small W  (flat path, replica slab stores)
    x1 = jax.random.normal(k1, (2, 4, 16, 16), dtype=jnp.float32)
    _check(x1, 2, 3, "f32 small")

    # 2) bf16, same shape (bf16 MXU replication path)
    _check(x1.astype(jnp.bfloat16), 2, 3, "bf16 small")

    # 3) f32, y_scale == 1 (typical mel-upsampler call: stretch time only)
    x3 = jax.random.normal(k3, (2, 1, 80, 32), dtype=jnp.float32)
    _check(x3, 4, 1, "f32 ys=1")

    # 4) f32, wide W -> tiled-W path with the inner row-replica axis
    x4 = jax.random.normal(k4, (1, 2, 8, 256), dtype=jnp.float32)
    _check(x4, 2, 2, "f32 tiled W")

    # 5) x_scale == 1 (no-matmul, pure row-replicate path)
    x5 = jax.random.normal(k2, (2, 3, 8, 16), dtype=jnp.float32)
    _check(x5, 1, 2, "f32 xs=1")

    print("KERNEL_OK")
</pallas_src>

<mosaic_0001>
module attributes {stable_mosaic.version = 11 : i64} {
  func.func @kernel(%arg0: i32, %arg1: memref<128x16xf32, #tpu.memory_space<vmem>>, %arg2: memref<128x96xf32, #tpu.memory_space<vmem>>) attributes {dimension_semantics = [#tpu.dimension_semantics<parallel>], iteration_bounds = array<i64: 1>, scalar_prefetch = 0 : i64, scratch_operands = 0 : i64, tpu.core_type = #tpu.core_type<tc>, window_params = [{transform_indices = @transform_0, window_bounds = array<i64: 128, 16>}, {transform_indices = @transform_1, window_bounds = array<i64: 128, 96>}]} {
    %c0 = arith.constant 0 : index
    %c0_0 = arith.constant 0 : index
    %0 = vector.load %arg1[%c0, %c0_0] : memref<128x16xf32, #tpu.memory_space<vmem>>, vector<128x16xf32>
    %1 = tpu.iota {dimensions = array<i32: 0>} : vector<16x32xi32>
    %2 = tpu.iota {dimensions = array<i32: 1>} : vector<16x32xi32>
    %c2_i32 = arith.constant 2 : i32
    %3 = vector.broadcast %c2_i32 : i32 to vector<16x32xi32>
    %4 = arith.muli %1, %3 : vector<16x32xi32>
    %5 = arith.cmpi sge, %2, %4 : vector<16x32xi32>
    %c2_i32_1 = arith.constant 2 : i32
    %6 = vector.broadcast %c2_i32_1 : i32 to vector<16x32xi32>
    %7 = arith.muli %1, %6 : vector<16x32xi32>
    %c2_i32_2 = arith.constant 2 : i32
    %8 = vector.broadcast %c2_i32_2 : i32 to vector<16x32xi32>
    %9 = arith.addi %7, %8 : vector<16x32xi32>
    %10 = arith.cmpi slt, %2, %9 : vector<16x32xi32>
    %11 = arith.andi %5, %10 : vector<16x32xi1>
    %12 = arith.extui %11 : vector<16x32xi1> to vector<16x32xi32>
    %13 = arith.sitofp %12 : vector<16x32xi32> to vector<16x32xf32>
    %cst = arith.constant dense<0.000000e+00> : vector<128x32xf32>
    %14 = tpu.matmul %0, %13, %cst {dimension_numbers = #tpu.dot_dimension_numbers<[1], [0], [0], [1], [0, 0, 1, 1], [], []>, precision = #tpu.contract_precision<fp32>} : vector<128x16xf32>, vector<16x32xf32>, vector<128x32xf32> -> vector<128x32xf32>
    %c0_3 = arith.constant 0 : index
    %c0_4 = arith.constant 0 : index
    %15 = vector.load %arg2[%c0_3, %c0_4] : memref<128x96xf32, #tpu.memory_space<vmem>>, vector<128x32xf32>
    tpu.vector_store %arg2[%c0_3, %c0_4], %14 {strides = array<i32>} : memref<128x96xf32, #tpu.memory_space<vmem>>, vector<128x32xf32>,
    %c0_5 = arith.constant 0 : index
    %c32 = arith.constant 32 : index
    %16 = vector.load %arg2[%c0_5, %c32] : memref<128x96xf32, #tpu.memory_space<vmem>>, vector<128x32xf32>
    tpu.vector_store %arg2[%c0_5, %c32], %14 {strides = array<i32>} : memref<128x96xf32, #tpu.memory_space<vmem>>, vector<128x32xf32>,
    %c0_6 = arith.constant 0 : index
    %c64 = arith.constant 64 : index
    %17 = vector.load %arg2[%c0_6, %c64] : memref<128x96xf32, #tpu.memory_space<vmem>>, vector<128x32xf32>
    tpu.vector_store %arg2[%c0_6, %c64], %14 {strides = array<i32>} : memref<128x96xf32, #tpu.memory_space<vmem>>, vector<128x32xf32>,
    return
  }
  func.func @transform_0(%arg0: i32) -> (i32, i32) {
    %c0_i32 = arith.constant 0 : i32
    %c0_i32_0 = arith.constant 0 : i32
    return %arg0, %c0_i32 : i32, i32
  }
  func.func @transform_1(%arg0: i32) -> (i32, i32) {
    %c0_i32 = arith.constant 0 : i32
    %c0_i32_0 = arith.constant 0 : i32
    return %arg0, %c0_i32 : i32, i32
  }
}

</mosaic_0001>

<llo_original>
// kernel: tpu_custom_call.1
$region0: #{tpu_custom_call.1}
  #allocation0 [shape = 'u32[]', space=smem, size = 0x4, offset = 0x4, fixed_abs, tag = 'smem constant byte address 0x4 - core index']
  #allocation1 [shape = 'u32[144,128]{1,0:T(1,128)}', space=vmem, size = 0x12000, scoped, tag = 'internal scratch']
  %s0 = inlined_call_operand.vmem [shape: f32[128,16], index: 0, kind: input, shape index: {}]
  %s1 = inlined_call_operand.vmem [shape: f32[128,96], index: 1, kind: output, shape index: {}]
  %s2 = sld [smem:[#allocation0]]
  $region14: #{tpu_custom_call.1} parent=0
    _
  %s4 = ssub.s32 1, %s2
  %s5 = scalar_select 0, %s4, %s2
  // Predicated region
  $region2: #{tpu_custom_call.1} parent=0 // pred_check
    _
  $region3: #{tpu_custom_call.1} parent=0 // pred_check_branch
    %7 = sbr.rel (0) target = $region5
  $region4: #{tpu_custom_call.1} parent=0 // pred_region
    _
  $region5: #{tpu_custom_call.1} parent=0 // pred_fallthru
    _
  %v8 = vld [vmem:[%s0] sm:$0xff]
  %v9 = vld [vmem:[%s0 + $0x8] sm:$0xff]
  %v10 = vld [vmem:[%s0 + $0x10] sm:$0xff]
  %v11 = vld [vmem:[%s0 + $0x18] sm:$0xff]
  %v12 = vld [vmem:[%s0 + $0x20] sm:$0xff]
  %v13 = vld [vmem:[%s0 + $0x28] sm:$0xff]
  %v14 = vld [vmem:[%s0 + $0x30] sm:$0xff]
  %v15 = vld [vmem:[%s0 + $0x38] sm:$0xff]
  %v16 = vld [vmem:[%s0 + $0x40] sm:$0xff]
  %v17 = vld [vmem:[%s0 + $0x48] sm:$0xff]
  %v18 = vld [vmem:[%s0 + $0x50] sm:$0xff]
  %v19 = vld [vmem:[%s0 + $0x58] sm:$0xff]
  %v20 = vld [vmem:[%s0 + $0x60] sm:$0xff]
  %v21 = vld [vmem:[%s0 + $0x68] sm:$0xff]
  %v22 = vld [vmem:[%s0 + $0x70] sm:$0xff]
  %v23 = vld [vmem:[%s0 + $0x78] sm:$0xff]
  %v24 = vlaneseq
  %v25 = vshrl.u32 %v24, 7
  %v26 = vadd.s32 %v25, 8
  %v27 = vlaneseq
  %v28 = vand.u32 %v27, 127
  %v29 = vmul.u32 %v25, 2
  %v30 = vmul.u32 %v26, 2
  %vm31 = vcmp.ge.s32.totalorder %v28, %v29
  %vm32 = vcmp.ge.s32.totalorder %v28, %v30
  %v33 = vadd.s32 %v29, 2
  %v34 = vadd.s32 %v30, 2
  %vm35 = vcmp.lt.s32.totalorder %v28, %v33
  %vm36 = vcmp.lt.s32.totalorder %v28, %v34
  %vm37 = vmand %vm31, %vm35
  %vm38 = vmand %vm32, %vm36
  %v39 = vsel %vm37, 1, 0
  %v40 = vsel %vm38, 1, 0
  %v41 = vcvt.s32.f32 %v39
  %v42 = vcvt.s32.f32 %v40
  %vm43 = vcmask 130048
  %v45 = vsel %vm43, %v8, 0
  %v48 = vsel %vm43, %v9, 0
  %v51 = vsel %vm43, %v10, 0
  %v54 = vsel %vm43, %v11, 0
  %v57 = vsel %vm43, %v12, 0
  %v60 = vsel %vm43, %v13, 0
  %v63 = vsel %vm43, %v14, 0
  %v66 = vsel %vm43, %v15, 0
  %v69 = vsel %vm43, %v16, 0
  %v72 = vsel %vm43, %v17, 0
  %v75 = vsel %vm43, %v18, 0
  %v78 = vsel %vm43, %v19, 0
  %v81 = vsel %vm43, %v20, 0
  %v84 = vsel %vm43, %v21, 0
  %v87 = vsel %vm43, %v22, 0
  %v90 = vsel %vm43, %v23, 0
  %92 = vmatprep.subr.mxu0 0.0
  %v93 = vand.u32 %v41, 4294901760
  %94 = vmatpush1.msra.mxu0 %v93
  %95 = vmatprep.subr.mxu0 0.0
  %v96 = vand.u32 %v42, 4294901760
  %97 = vmatpush1.msra.mxu0 %v96
  %98 = vmatprep.subr.mxu0 0.0
  %99 = vmatpush1.msra.mxu0 0.0
  %100 = vmatprep.subr.mxu0 0.0
  %101 = vmatpush1.msra.mxu0 0.0
  %102 = vmatprep.subr.mxu0 0.0
  %103 = vmatpush1.msra.mxu0 0.0
  %104 = vmatprep.subr.mxu0 0.0
  %105 = vmatpush1.msra.mxu0 0.0
  %106 = vmatprep.subr.mxu0 0.0
  %107 = vmatpush1.msra.mxu0 0.0
  %108 = vmatprep.subr.mxu0 0.0
  %109 = vmatpush1.msra.mxu0 0.0
  %110 = vmatprep.subr.mxu0 0.0
  %111 = vmatpush1.msra.mxu0 0.0
  %112 = vmatprep.subr.mxu0 0.0
  %113 = vmatpush1.msra.mxu0 0.0
  %114 = vmatprep.subr.mxu0 0.0
  %115 = vmatpush1.msra.mxu0 0.0
  %116 = vmatprep.subr.mxu0 0.0
  %117 = vmatpush1.msra.mxu0 0.0
  %118 = vmatprep.subr.mxu0 0.0
  %119 = vmatpush1.msra.mxu0 0.0
  %120 = vmatprep.subr.mxu0 0.0
  %121 = vmatpush1.msra.mxu0 0.0
  %122 = vmatprep.subr.mxu0 0.0
  %123 = vmatpush1.msra.mxu0 0.0
  %124 = vmatprep.subr.mxu0 0.0
  %125 = vmatpush1.msra.mxu0 0.0
  %126 = vmatprep.subr.mxu0 0.0
  %127 = vmatpush1.msra.mxu0 0.0
  %128 = vmatprep.subr.mxu0 0.0
  %129 = vmatpush1.msra.mxu0 0.0
  %130 = vmatprep.subr.mxu0 0.0
  %131 = vmatpush1.msra.mxu0 0.0
  %132 = vmatprep.subr.mxu0 0.0
  %133 = vmatpush1.msra.mxu0 0.0
  %134 = vmatprep.subr.mxu0 0.0
  %135 = vmatpush1.msra.mxu0 0.0
  %136 = vmatprep.subr.mxu0 0.0
  %137 = vmatpush1.msra.mxu0 0.0
  %138 = vmatprep.subr.mxu0 0.0
  %139 = vmatpush1.msra.mxu0 0.0
  %140 = vmatprep.subr.mxu0 0.0
  %141 = vmatpush1.msra.mxu0 0.0
  %142 = vmatprep.subr.mxu0 0.0
  %143 = vmatpush1.msra.mxu0 0.0
  %144 = vmatprep.subr.mxu0 0.0
  %145 = vmatpush1.msra.mxu0 0.0
  %146 = vmatprep.subr.mxu0 0.0
  %147 = vmatpush1.msra.mxu0 0.0
  %148 = vmatprep.subr.mxu0 0.0
  %149 = vmatpush1.msra.mxu0 0.0
  %150 = vmatprep.subr.mxu0 0.0
  %151 = vmatpush1.msra.mxu0 0.0
  %152 = vmatprep.subr.mxu0 0.0
  %153 = vmatpush1.msra.mxu0 0.0
  %154 = vmatprep.subr.mxu0 0.0
  %155 = vmatpush1.msra.mxu0 0.0
  %156 = vmatprep.subr.mxu0 0.0
  %157 = vmatpush1.msra.mxu0 0.0
  %158 = vmatprep.mubr.f32.mxu0 0.0
  %v159 = vand.u32 %v45, 4294901760
  %v160 = vsub.f32 %v45, %v159
  %v161 = vand.u32 %v160, 4294901760
  %v162 = vsub.f32 %v160, %v161
  %v163 = vand.u32 %v162, 4294901760
  %164 = vmatmul.mubr.f32.gmra.mrb[0].mxu0 %v163
  %v165 = vpop.f32.mrb[0].mxu0
  %v166 = vadd.f32 0.0, %v165
  %v167 = vpop.f32.mrb[0].mxu0
  %168 = vmatprep.mubr.f32.mxu0 0.0
  %v169 = vand.u32 %v48, 4294901760
  %v170 = vsub.f32 %v48, %v169
  %v171 = vand.u32 %v170, 4294901760
  %v172 = vsub.f32 %v170, %v171
  %v173 = vand.u32 %v172, 4294901760
  %174 = vmatmul.mubr.f32.gmra.mrb[0].mxu0 %v173
  %v175 = vpop.f32.mrb[0].mxu0
  %v176 = vadd.f32 0.0, %v175
  %v177 = vpop.f32.mrb[0].mxu0
  %178 = vmatprep.mubr.f32.mxu0 0.0
  %v179 = vand.u32 %v51, 4294901760
  %v180 = vsub.f32 %v51, %v179
  %v181 = vand.u32 %v180, 4294901760
  %v182 = vsub.f32 %v180, %v181
  %v183 = vand.u32 %v182, 4294901760
  %184 = vmatmul.mubr.f32.gmra.mrb[0].mxu0 %v183
  %v185 = vpop.f32.mrb[0].mxu0
  %v186 = vadd.f32 0.0, %v185
  %v187 = vpop.f32.mrb[0].mxu0
  %188 = vmatprep.mubr.f32.mxu0 0.0
  %v189 = vand.u32 %v54, 4294901760
  %v190 = vsub.f32 %v54, %v189
  %v191 = vand.u32 %v190, 4294901760
  %v192 = vsub.f32 %v190, %v191
  %v193 = vand.u32 %v192, 4294901760
  %194 = vmatmul.mubr.f32.gmra.mrb[0].mxu0 %v193
  %v195 = vpop.f32.mrb[0].mxu0
  %v196 = vadd.f32 0.0, %v195
  %v197 = vpop.f32.mrb[0].mxu0
  %198 = vmatprep.mubr.f32.mxu0 0.0
  %v199 = vand.u32 %v57, 4294901760
  %v200 = vsub.f32 %v57, %v199
  %v201 = vand.u32 %v200, 4294901760
  %v202 = vsub.f32 %v200, %v201
  %v203 = vand.u32 %v202, 4294901760
  %204 = vmatmul.mubr.f32.gmra.mrb[0].mxu0 %v203
  %v205 = vpop.f32.mrb[0].mxu0
  %v206 = vadd.f32 0.0, %v205
  %v207 = vpop.f32.mrb[0].mxu0
  %208 = vmatprep.mubr.f32.mxu0 0.0
  %v209 = vand.u32 %v60, 4294901760
  %v210 = vsub.f32 %v60, %v209
  %v211 = vand.u32 %v210, 4294901760
  %v212 = vsub.f32 %v210, %v211
  %v213 = vand.u32 %v212, 4294901760
  %214 = vmatmul.mubr.f32.gmra.mrb[0].mxu0 %v213
  %v215 = vpop.f32.mrb[0].mxu0
  %v216 = vadd.f32 0.0, %v215
  %v217 = vpop.f32.mrb[0].mxu0
  %218 = vmatprep.mubr.f32.mxu0 0.0
  %v219 = vand.u32 %v63, 4294901760
  %v220 = vsub.f32 %v63, %v219
  %v221 = vand.u32 %v220, 4294901760
  %v222 = vsub.f32 %v220, %v221
  %v223 = vand.u32 %v222, 4294901760
  %224 = vmatmul.mubr.f32.gmra.mrb[0].mxu0 %v223
  %v225 = vpop.f32.mrb[0].mxu0
  %v226 = vadd.f32 0.0, %v225
  %v227 = vpop.f32.mrb[0].mxu0
  %228 = vmatprep.mubr.f32.mxu0 0.0
  %v229 = vand.u32 %v66, 4294901760
  %v230 = vsub.f32 %v66, %v229
  %v231 = vand.u32 %v230, 4294901760
  %v232 = vsub.f32 %v230, %v231
  %v233 = vand.u32 %v232, 4294901760
  %234 = vmatmul.mubr.f32.gmra.mrb[0].mxu0 %v233
  %v235 = vpop.f32.mrb[0].mxu0
  %v236 = vadd.f32 0.0, %v235
  %v237 = vpop.f32.mrb[0].mxu0
  %238 = vmatprep.mubr.f32.mxu0 0.0
  %v239 = vand.u32 %v69, 4294901760
  %v240 = vsub.f32 %v69, %v239
  %v241 = vand.u32 %v240, 4294901760
  %v242 = vsub.f32 %v240, %v241
  %v243 = vand.u32 %v242, 4294901760
  %244 = vmatmul.mubr.f32.gmra.mrb[0].mxu0 %v243
  %v245 = vpop.f32.mrb[0].mxu0
  %v246 = vadd.f32 0.0, %v245
  %v247 = vpop.f32.mrb[0].mxu0
  %248 = vmatprep.mubr.f32.mxu0 0.0
  %v249 = vand.u32 %v72, 4294901760
  %v250 = vsub.f32 %v72, %v249
  %v251 = vand.u32 %v250, 4294901760
  %v252 = vsub.f32 %v250, %v251
  %v253 = vand.u32 %v252, 4294901760
  %254 = vmatmul.mubr.f32.gmra.mrb[0].mxu0 %v253
  %v255 = vpop.f32.mrb[0].mxu0
  %v256 = vadd.f32 0.0, %v255
  %v257 = vpop.f32.mrb[0].mxu0
  %258 = vmatprep.mubr.f32.mxu0 0.0
  %v259 = vand.u32 %v75, 4294901760
  %v260 = vsub.f32 %v75, %v259
  %v261 = vand.u32 %v260, 4294901760
  %v262 = vsub.f32 %v260, %v261
  %v263 = vand.u32 %v262, 4294901760
  %264 = vmatmul.mubr.f32.gmra.mrb[0].mxu0 %v263
  %v265 = vpop.f32.mrb[0].mxu0
  %v266 = vadd.f32 0.0, %v265
  %v267 = vpop.f32.mrb[0].mxu0
  %268 = vmatprep.mubr.f32.mxu0 0.0
  %v269 = vand.u32 %v78, 4294901760
  %v270 = vsub.f32 %v78, %v269
  %v271 = vand.u32 %v270, 4294901760
  %v272 = vsub.f32 %v270, %v271
  %v273 = vand.u32 %v272, 4294901760
  %274 = vmatmul.mubr.f32.gmra.mrb[0].mxu0 %v273
  %v275 = vpop.f32.mrb[0].mxu0
  %v276 = vadd.f32 0.0, %v275
  %v277 = vpop.f32.mrb[0].mxu0
  %278 = vmatprep.mubr.f32.mxu0 0.0
  %v279 = vand.u32 %v81, 4294901760
  %v280 = vsub.f32 %v81, %v279
  %v281 = vand.u32 %v280, 4294901760
  %v282 = vsub.f32 %v280, %v281
  %v283 = vand.u32 %v282, 4294901760
  %284 = vmatmul.mubr.f32.gmra.mrb[0].mxu0 %v283
  %v285 = vpop.f32.mrb[0].mxu0
  %v286 = vadd.f32 0.0, %v285
  %v287 = vpop.f32.mrb[0].mxu0
  %288 = vmatprep.mubr.f32.mxu0 0.0
  %v289 = vand.u32 %v84, 4294901760
  %v290 = vsub.f32 %v84, %v289
  %v291 = vand.u32 %v290, 4294901760
  %v292 = vsub.f32 %v290, %v291
  %v293 = vand.u32 %v292, 4294901760
  %294 = vmatmul.mubr.f32.gmra.mrb[0].mxu0 %v293
  %v295 = vpop.f32.mrb[0].mxu0
  %v296 = vadd.f32 0.0, %v295
  %v297 = vpop.f32.mrb[0].mxu0
  %298 = vmatprep.mubr.f32.mxu0 0.0
  %v299 = vand.u32 %v87, 4294901760
  %v300 = vsub.f32 %v87, %v299
  %v301 = vand.u32 %v300, 4294901760
  %v302 = vsub.f32 %v300, %v301
  %v303 = vand.u32 %v302, 4294901760
  %304 = vmatmul.mubr.f32.gmra.mrb[0].mxu0 %v303
  %v305 = vpop.f32.mrb[0].mxu0
  %v306 = vadd.f32 0.0, %v305
  %v307 = vpop.f32.mrb[0].mxu0
  %308 = vmatprep.mubr.f32.mxu0 0.0
  %v309 = vand.u32 %v90, 4294901760
  %v310 = vsub.f32 %v90, %v309
  %v311 = vand.u32 %v310, 4294901760
  %v312 = vsub.f32 %v310, %v311
  %v313 = vand.u32 %v312, 4294901760
  %314 = vmatmul.mubr.f32.gmra.mrb[0].mxu0 %v313
  %v315 = vpop.f32.mrb[0].mxu0
  %v316 = vadd.f32 0.0, %v315
  %v317 = vpop.f32.mrb[0].mxu0
  %318 = vdwg.mxu0
  %319 = vmatprep.subr.mxu0 0.0
  %v320 = vand.u32 %v41, 4294901760
  %v321 = vsub.f32 %v41, %v320
  %v322 = vand.u32 %v321, 4294901760
  %v323 = vsub.f32 %v321, %v322
  %v324 = vand.u32 %v323, 4294901760
  %325 = vmatpush1.msra.mxu0 %v324
  %326 = vmatprep.subr.mxu0 0.0
  %v327 = vand.u32 %v42, 4294901760
  %v328 = vsub.f32 %v42, %v327
  %v329 = vand.u32 %v328, 4294901760
  %v330 = vsub.f32 %v328, %v329
  %v331 = vand.u32 %v330, 4294901760
  %332 = vmatpush1.msra.mxu0 %v331
  %333 = vmatprep.subr.mxu0 0.0
  %334 = vmatpush1.msra.mxu0 0.0
  %335 = vmatprep.subr.mxu0 0.0
  %336 = vmatpush1.msra.mxu0 0.0
  %337 = vmatprep.subr.mxu0 0.0
  %338 = vmatpush1.msra.mxu0 0.0
  %339 = vmatprep.subr.mxu0 0.0
  %340 = vmatpush1.msra.mxu0 0.0
  %341 = vmatprep.subr.mxu0 0.0
  %342 = vmatpush1.msra.mxu0 0.0
  %343 = vmatprep.subr.mxu0 0.0
  %344 = vmatpush1.msra.mxu0 0.0
  %345 = vmatprep.subr.mxu0 0.0
  %346 = vmatpush1.msra.mxu0 0.0
  %347 = vmatprep.subr.mxu0 0.0
  %348 = vmatpush1.msra.mxu0 0.0
  %349 = vmatprep.subr.mxu0 0.0
  %350 = vmatpush1.msra.mxu0 0.0
  %351 = vmatprep.subr.mxu0 0.0
  %352 = vmatpush1.msra.mxu0 0.0
  %353 = vmatprep.subr.mxu0 0.0
  %354 = vmatpush1.msra.mxu0 0.0
  %355 = vmatprep.subr.mxu0 0.0
  %356 = vmatpush1.msra.mxu0 0.0
  %357 = vmatprep.subr.mxu0 0.0
  %358 = vmatpush1.msra.mxu0 0.0
  %359 = vmatprep.subr.mxu0 0.0
  %360 = vmatpush1.msra.mxu0 0.0
  %361 = vmatprep.subr.mxu0 0.0
  %362 = vmatpush1.msra.mxu0 0.0
  %363 = vmatprep.subr.mxu0 0.0
  %364 = vmatpush1.msra.mxu0 0.0
  %365 = vmatprep.subr.mxu0 0.0
  %366 = vmatpush1.msra.mxu0 0.0
  %367 = vmatprep.subr.mxu0 0.0
  %368 = vmatpush1.msra.mxu0 0.0
  %369 = vmatprep.subr.mxu0 0.0
  %370 = vmatpush1.msra.mxu0 0.0
  %371 = vmatprep.subr.mxu0 0.0
  %372 = vmatpush1.msra.mxu0 0.0
  %373 = vmatprep.subr.mxu0 0.0
  %374 = vmatpush1.msra.mxu0 0.0
  %375 = vmatprep.subr.mxu0 0.0
  %376 = vmatpush1.msra.mxu0 0.0
  %377 = vmatprep.subr.mxu0 0.0
  %378 = vmatpush1.msra.mxu0 0.0
  %379 = vmatprep.subr.mxu0 0.0
  %380 = vmatpush1.msra.mxu0 0.0
  %381 = vmatprep.subr.mxu0 0.0
  %382 = vmatpush1.msra.mxu0 0.0
  %383 = vmatprep.subr.mxu0 0.0
  %384 = vmatpush1.msra.mxu0 0.0
  %385 = vmatprep.subr.mxu0 0.0
  %386 = vmatpush1.msra.mxu0 0.0
  %387 = vmatprep.subr.mxu0 0.0
  %388 = vmatpush1.msra.mxu0 0.0
  %389 = vmatprep.subr.mxu0 0.0
  %390 = vmatpush1.msra.mxu0 0.0
  %391 = vmatprep.subr.mxu0 0.0
  %392 = vmatpush1.msra.mxu0 0.0
  %393 = vmatprep.mubr.f32.mxu0 0.0
  %v394 = vand.u32 %v45, 4294901760
  %395 = vmatmul.mubr.f32.gmra.mrb[0].mxu0 %v394
  %v396 = vpop.f32.mrb[0].mxu0
  %v397 = vadd.f32 %v166, %v396
  %v398 = vpop.f32.mrb[0].mxu0
  %399 = vmatprep.mubr.f32.mxu0 0.0
  %v400 = vand.u32 %v48, 4294901760
  %401 = vmatmul.mubr.f32.gmra.mrb[0].mxu0 %v400
  %v402 = vpop.f32.mrb[0].mxu0
  %v403 = vadd.f32 %v176, %v402
  %v404 = vpop.f32.mrb[0].mxu0
  %405 = vmatprep.mubr.f32.mxu0 0.0
  %v406 = vand.u32 %v51, 4294901760
  %407 = vmatmul.mubr.f32.gmra.mrb[0].mxu0 %v406
  %v408 = vpop.f32.mrb[0].mxu0
  %v409 = vadd.f32 %v186, %v408
  %v410 = vpop.f32.mrb[0].mxu0
  %411 = vmatprep.mubr.f32.mxu0 0.0
  %v412 = vand.u32 %v54, 4294901760
  %413 = vmatmul.mubr.f32.gmra.mrb[0].mxu0 %v412
  %v414 = vpop.f32.mrb[0].mxu0
  %v415 = vadd.f32 %v196, %v414
  %v416 = vpop.f32.mrb[0].mxu0
  %417 = vmatprep.mubr.f32.mxu0 0.0
  %v418 = vand.u32 %v57, 4294901760
  %419 = vmatmul.mubr.f32.gmra.mrb[0].mxu0 %v418
  %v420 = vpop.f32.mrb[0].mxu0
  %v421 = vadd.f32 %v206, %v420
  %v422 = vpop.f32.mrb[0].mxu0
  %423 = vmatprep.mubr.f32.mxu0 0.0
  %v424 = vand.u32 %v60, 4294901760
  %425 = vmatmul.mubr.f32.gmra.mrb[0].mxu0 %v424
  %v426 = vpop.f32.mrb[0].mxu0
  %v427 = vadd.f32 %v216, %v426
  %v428 = vpop.f32.mrb[0].mxu0
  %429 = vmatprep.mubr.f32.mxu0 0.0
  %v430 = vand.u32 %v63, 4294901760
  %431 = vmatmul.mubr.f32.gmra.mrb[0].mxu0 %v430
  %v432 = vpop.f32.mrb[0].mxu0
  %v433 = vadd.f32 %v226, %v432
  %v434 = vpop.f32.mrb[0].mxu0
  %435 = vmatprep.mubr.f32.mxu0 0.0
  %v436 = vand.u32 %v66, 4294901760
  %437 = vmatmul.mubr.f32.gmra.mrb[0].mxu0 %v436
  %v438 = vpop.f32.mrb[0].mxu0
  %v439 = vadd.f32 %v236, %v438
  %v440 = vpop.f32.mrb[0].mxu0
  %441 = vmatprep.mubr.f32.mxu0 0.0
  %v442 = vand.u32 %v69, 4294901760
  %443 = vmatmul.mubr.f32.gmra.mrb[0].mxu0 %v442
  %v444 = vpop.f32.mrb[0].mxu0
  %v445 = vadd.f32 %v246, %v444
  %v446 = vpop.f32.mrb[0].mxu0
  %447 = vmatprep.mubr.f32.mxu0 0.0
  %v448 = vand.u32 %v72, 4294901760
  %449 = vmatmul.mubr.f32.gmra.mrb[0].mxu0 %v448
  %v450 = vpop.f32.mrb[0].mxu0
  %v451 = vadd.f32 %v256, %v450
  %v452 = vpop.f32.mrb[0].mxu0
  %453 = vmatprep.mubr.f32.mxu0 0.0
  %v454 = vand.u32 %v75, 4294901760
  %455 = vmatmul.mubr.f32.gmra.mrb[0].mxu0 %v454
  %v456 = vpop.f32.mrb[0].mxu0
  %v457 = vadd.f32 %v266, %v456
  %v458 = vpop.f32.mrb[0].mxu0
  %459 = vmatprep.mubr.f32.mxu0 0.0
  %v460 = vand.u32 %v78, 4294901760
  %461 = vmatmul.mubr.f32.gmra.mrb[0].mxu0 %v460
  %v462 = vpop.f32.mrb[0].mxu0
  %v463 = vadd.f32 %v276, %v462
  %v464 = vpop.f32.mrb[0].mxu0
  %465 = vmatprep.mubr.f32.mxu0 0.0
  %v466 = vand.u32 %v81, 4294901760
  %467 = vmatmul.mubr.f32.gmra.mrb[0].mxu0 %v466
  %v468 = vpop.f32.mrb[0].mxu0
  %v469 = vadd.f32 %v286, %v468
  %v470 = vpop.f32.mrb[0].mxu0
  %471 = vmatprep.mubr.f32.mxu0 0.0
  %v472 = vand.u32 %v84, 4294901760
  %473 = vmatmul.mubr.f32.gmra.mrb[0].mxu0 %v472
  %v474 = vpop.f32.mrb[0].mxu0
  %v475 = vadd.f32 %v296, %v474
  %v476 = vpop.f32.mrb[0].mxu0
  %477 = vmatprep.mubr.f32.mxu0 0.0
  %v478 = vand.u32 %v87, 4294901760
  %479 = vmatmul.mubr.f32.gmra.mrb[0].mxu0 %v478
  %v480 = vpop.f32.mrb[0].mxu0
  %v481 = vadd.f32 %v306, %v480
  %v482 = vpop.f32.mrb[0].mxu0
  %483 = vmatprep.mubr.f32.mxu0 0.0
  %v484 = vand.u32 %v90, 4294901760
  %485 = vmatmul.mubr.f32.gmra.mrb[0].mxu0 %v484
  %v486 = vpop.f32.mrb[0].mxu0
  %v487 = vadd.f32 %v316, %v486
  %v488 = vpop.f32.mrb[0].mxu0
  %489 = vdwg.mxu0
  %490 = vmatprep.subr.mxu0 0.0
  %v491 = vand.u32 %v41, 4294901760
  %v492 = vsub.f32 %v41, %v491
  %493 = vmatpush1.msra.mxu0 %v492
  %494 = vmatprep.subr.mxu0 0.0
  %v495 = vand.u32 %v42, 4294901760
  %v496 = vsub.f32 %v42, %v495
  %497 = vmatpush1.msra.mxu0 %v496
  %498 = vmatprep.subr.mxu0 0.0
  %499 = vmatpush1.msra.mxu0 0.0
  %500 = vmatprep.subr.mxu0 0.0
  %501 = vmatpush1.msra.mxu0 0.0
  %502 = vmatprep.subr.mxu0 0.0
  %503 = vmatpush1.msra.mxu0 0.0
  %504 = vmatprep.subr.mxu0 0.0
  %505 = vmatpush1.msra.mxu0 0.0
  %506 = vmatprep.subr.mxu0 0.0
  %507 = vmatpush1.msra.mxu0 0.0
  %508 = vmatprep.subr.mxu0 0.0
  %509 = vmatpush1.msra.mxu0 0.0
  %510 = vmatprep.subr.mxu0 0.0
  %511 = vmatpush1.msra.mxu0 0.0
  %512 = vmatprep.subr.mxu0 0.0
  %513 = vmatpush1.msra.mxu0 0.0
  %514 = vmatprep.subr.mxu0 0.0
  %515 = vmatpush1.msra.mxu0 0.0
  %516 = vmatprep.subr.mxu0 0.0
  %517 = vmatpush1.msra.mxu0 0.0
  %518 = vmatprep.subr.mxu0 0.0
  %519 = vmatpush1.msra.mxu0 0.0
  %520 = vmatprep.subr.mxu0 0.0
  %521 = vmatpush1.msra.mxu0 0.0
  %522 = vmatprep.subr.mxu0 0.0
  %523 = vmatpush1.msra.mxu0 0.0
  %524 = vmatprep.subr.mxu0 0.0
  %525 = vmatpush1.msra.mxu0 0.0
  %526 = vmatprep.subr.mxu0 0.0
  %527 = vmatpush1.msra.mxu0 0.0
  %528 = vmatprep.subr.mxu0 0.0
  %529 = vmatpush1.msra.mxu0 0.0
  %530 = vmatprep.subr.mxu0 0.0
  %531 = vmatpush1.msra.mxu0 0.0
  %532 = vmatprep.subr.mxu0 0.0
  %533 = vmatpush1.msra.mxu0 0.0
  %534 = vmatprep.subr.mxu0 0.0
  %535 = vmatpush1.msra.mxu0 0.0
  %536 = vmatprep.subr.mxu0 0.0
  %537 = vmatpush1.msra.mxu0 0.0
  %538 = vmatprep.subr.mxu0 0.0
  %539 = vmatpush1.msra.mxu0 0.0
  %540 = vmatprep.subr.mxu0 0.0
  %541 = vmatpush1.msra.mxu0 0.0
  %542 = vmatprep.subr.mxu0 0.0
  %543 = vmatpush1.msra.mxu0 0.0
  %544 = vmatprep.subr.mxu0 0.0
  %545 = vmatpush1.msra.mxu0 0.0
  %546 = vmatprep.subr.mxu0 0.0
  %547 = vmatpush1.msra.mxu0 0.0
  %548 = vmatprep.subr.mxu0 0.0
  %549 = vmatpush1.msra.mxu0 0.0
  %550 = vmatprep.subr.mxu0 0.0
  %551 = vmatpush1.msra.mxu0 0.0
  %552 = vmatprep.subr.mxu0 0.0
  %553 = vmatpush1.msra.mxu0 0.0
  %554 = vmatprep.subr.mxu0 0.0
  %555 = vmatpush1.msra.mxu0 0.0
  %556 = vmatprep.subr.mxu0 0.0
  %557 = vmatpush1.msra.mxu0 0.0
  %558 = vmatprep.mubr.f32.mxu0 0.0
  %v559 = vand.u32 %v45, 4294901760
  %v560 = vsub.f32 %v45, %v559
  %561 = vmatmul.mubr.f32.gmra.mrb[0].mxu0 %v560
  %v562 = vpop.f32.mrb[0].mxu0
  %v563 = vadd.f32 %v397, %v562
  %v564 = vpop.f32.mrb[0].mxu0
  %565 = vmatprep.mubr.f32.mxu0 0.0
  %v566 = vand.u32 %v48, 4294901760
  %v567 = vsub.f32 %v48, %v566
  %568 = vmatmul.mubr.f32.gmra.mrb[0].mxu0 %v567
  %v569 = vpop.f32.mrb[0].mxu0
  %v570 = vadd.f32 %v403, %v569
  %v571 = vpop.f32.mrb[0].mxu0
  %572 = vmatprep.mubr.f32.mxu0 0.0
  %v573 = vand.u32 %v51, 4294901760
  %v574 = vsub.f32 %v51, %v573
  %575 = vmatmul.mubr.f32.gmra.mrb[0].mxu0 %v574
  %v576 = vpop.f32.mrb[0].mxu0
  %v577 = vadd.f32 %v409, %v576
  %v578 = vpop.f32.mrb[0].mxu0
  %579 = vmatprep.mubr.f32.mxu0 0.0
  %v580 = vand.u32 %v54, 4294901760
  %v581 = vsub.f32 %v54, %v580
  %582 = vmatmul.mubr.f32.gmra.mrb[0].mxu0 %v581
  %v583 = vpop.f32.mrb[0].mxu0
  %v584 = vadd.f32 %v415, %v583
  %v585 = vpop.f32.mrb[0].mxu0
  %586 = vmatprep.mubr.f32.mxu0 0.0
  %v587 = vand.u32 %v57, 4294901760
  %v588 = vsub.f32 %v57, %v587
  %589 = vmatmul.mubr.f32.gmra.mrb[0].mxu0 %v588
  %v590 = vpop.f32.mrb[0].mxu0
  %v591 = vadd.f32 %v421, %v590
  %v592 = vpop.f32.mrb[0].mxu0
  %593 = vmatprep.mubr.f32.mxu0 0.0
  %v594 = vand.u32 %v60, 4294901760
  %v595 = vsub.f32 %v60, %v594
  %596 = vmatmul.mubr.f32.gmra.mrb[0].mxu0 %v595
  %v597 = vpop.f32.mrb[0].mxu0
  %v598 = vadd.f32 %v427, %v597
  %v599 = vpop.f32.mrb[0].mxu0
  %600 = vmatprep.mubr.f32.mxu0 0.0
  %v601 = vand.u32 %v63, 4294901760
  %v602 = vsub.f32 %v63, %v601
  %603 = vmatmul.mubr.f32.gmra.mrb[0].mxu0 %v602
  %v604 = vpop.f32.mrb[0].mxu0
  %v605 = vadd.f32 %v433, %v604
  %v606 = vpop.f32.mrb[0].mxu0
  %607 = vmatprep.mubr.f32.mxu0 0.0
  %v608 = vand.u32 %v66, 4294901760
  %v609 = vsub.f32 %v66, %v608
  %610 = vmatmul.mubr.f32.gmra.mrb[0].mxu0 %v609
  %v611 = vpop.f32.mrb[0].mxu0
  %v612 = vadd.f32 %v439, %v611
  %v613 = vpop.f32.mrb[0].mxu0
  %614 = vmatprep.mubr.f32.mxu0 0.0
  %v615 = vand.u32 %v69, 4294901760
  %v616 = vsub.f32 %v69, %v615
  %617 = vmatmul.mubr.f32.gmra.mrb[0].mxu0 %v616
  %v618 = vpop.f32.mrb[0].mxu0
  %v619 = vadd.f32 %v445, %v618
  %v620 = vpop.f32.mrb[0].mxu0
  %621 = vmatprep.mubr.f32.mxu0 0.0
  %v622 = vand.u32 %v72, 4294901760
  %v623 = vsub.f32 %v72, %v622
  %624 = vmatmul.mubr.f32.gmra.mrb[0].mxu0 %v623
  %v625 = vpop.f32.mrb[0].mxu0
  %v626 = vadd.f32 %v451, %v625
  %v627 = vpop.f32.mrb[0].mxu0
  %628 = vmatprep.mubr.f32.mxu0 0.0
  %v629 = vand.u32 %v75, 4294901760
  %v630 = vsub.f32 %v75, %v629
  %631 = vmatmul.mubr.f32.gmra.mrb[0].mxu0 %v630
  %v632 = vpop.f32.mrb[0].mxu0
  %v633 = vadd.f32 %v457, %v632
  %v634 = vpop.f32.mrb[0].mxu0
  %635 = vmatprep.mubr.f32.mxu0 0.0
  %v636 = vand.u32 %v78, 4294901760
  %v637 = vsub.f32 %v78, %v636
  %638 = vmatmul.mubr.f32.gmra.mrb[0].mxu0 %v637
  %v639 = vpop.f32.mrb[0].mxu0
  %v640 = vadd.f32 %v463, %v639
  %v641 = vpop.f32.mrb[0].mxu0
  %642 = vmatprep.mubr.f32.mxu0 0.0
  %v643 = vand.u32 %v81, 4294901760
  %v644 = vsub.f32 %v81, %v643
  %645 = vmatmul.mubr.f32.gmra.mrb[0].mxu0 %v644
  %v646 = vpop.f32.mrb[0].mxu0
  %v647 = vadd.f32 %v469, %v646
  %v648 = vpop.f32.mrb[0].mxu0
  %649 = vmatprep.mubr.f32.mxu0 0.0
  %v650 = vand.u32 %v84, 4294901760
  %v651 = vsub.f32 %v84, %v650
  %652 = vmatmul.mubr.f32.gmra.mrb[0].mxu0 %v651
  %v653 = vpop.f32.mrb[0].mxu0
  %v654 = vadd.f32 %v475, %v653
  %v655 = vpop.f32.mrb[0].mxu0
  %656 = vmatprep.mubr.f32.mxu0 0.0
  %v657 = vand.u32 %v87, 4294901760
  %v658 = vsub.f32 %v87, %v657
  %659 = vmatmul.mubr.f32.gmra.mrb[0].mxu0 %v658
  %v660 = vpop.f32.mrb[0].mxu0
  %v661 = vadd.f32 %v481, %v660
  %v662 = vpop.f32.mrb[0].mxu0
  %663 = vmatprep.mubr.f32.mxu0 0.0
  %v664 = vand.u32 %v90, 4294901760
  %v665 = vsub.f32 %v90, %v664
  %666 = vmatmul.mubr.f32.gmra.mrb[0].mxu0 %v665
  %v667 = vpop.f32.mrb[0].mxu0
  %v668 = vadd.f32 %v487, %v667
  %v669 = vpop.f32.mrb[0].mxu0
  %670 = vdwg.mxu0
  %671 = vmatprep.subr.mxu0 0.0
  %v672 = vand.u32 %v41, 4294901760
  %673 = vmatpush1.msra.mxu0 %v672
  %674 = vmatprep.subr.mxu0 0.0
  %v675 = vand.u32 %v42, 4294901760
  %676 = vmatpush1.msra.mxu0 %v675
  %677 = vmatprep.subr.mxu0 0.0
  %678 = vmatpush1.msra.mxu0 0.0
  %679 = vmatprep.subr.mxu0 0.0
  %680 = vmatpush1.msra.mxu0 0.0
  %681 = vmatprep.subr.mxu0 0.0
  %682 = vmatpush1.msra.mxu0 0.0
  %683 = vmatprep.subr.mxu0 0.0
  %684 = vmatpush1.msra.mxu0 0.0
  %685 = vmatprep.subr.mxu0 0.0
  %686 = vmatpush1.msra.mxu0 0.0
  %687 = vmatprep.subr.mxu0 0.0
  %688 = vmatpush1.msra.mxu0 0.0
  %689 = vmatprep.subr.mxu0 0.0
  %690 = vmatpush1.msra.mxu0 0.0
  %691 = vmatprep.subr.mxu0 0.0
  %692 = vmatpush1.msra.mxu0 0.0
  %693 = vmatprep.subr.mxu0 0.0
  %694 = vmatpush1.msra.mxu0 0.0
  %695 = vmatprep.subr.mxu0 0.0
  %696 = vmatpush1.msra.mxu0 0.0
  %697 = vmatprep.subr.mxu0 0.0
  %698 = vmatpush1.msra.mxu0 0.0
  %699 = vmatprep.subr.mxu0 0.0
  %700 = vmatpush1.msra.mxu0 0.0
  %701 = vmatprep.subr.mxu0 0.0
  %702 = vmatpush1.msra.mxu0 0.0
  %703 = vmatprep.subr.mxu0 0.0
  %704 = vmatpush1.msra.mxu0 0.0
  %705 = vmatprep.subr.mxu0 0.0
  %706 = vmatpush1.msra.mxu0 0.0
  %707 = vmatprep.subr.mxu0 0.0
  %708 = vmatpush1.msra.mxu0 0.0
  %709 = vmatprep.subr.mxu0 0.0
  %710 = vmatpush1.msra.mxu0 0.0
  %711 = vmatprep.subr.mxu0 0.0
  %712 = vmatpush1.msra.mxu0 0.0
  %713 = vmatprep.subr.mxu0 0.0
  %714 = vmatpush1.msra.mxu0 0.0
  %715 = vmatprep.subr.mxu0 0.0
  %716 = vmatpush1.msra.mxu0 0.0
  %717 = vmatprep.subr.mxu0 0.0
  %718 = vmatpush1.msra.mxu0 0.0
  %719 = vmatprep.subr.mxu0 0.0
  %720 = vmatpush1.msra.mxu0 0.0
  %721 = vmatprep.subr.mxu0 0.0
  %722 = vmatpush1.msra.mxu0 0.0
  %723 = vmatprep.subr.mxu0 0.0
  %724 = vmatpush1.msra.mxu0 0.0
  %725 = vmatprep.subr.mxu0 0.0
  %726 = vmatpush1.msra.mxu0 0.0
  %727 = vmatprep.subr.mxu0 0.0
  %728 = vmatpush1.msra.mxu0 0.0
  %729 = vmatprep.subr.mxu0 0.0
  %730 = vmatpush1.msra.mxu0 0.0
  %731 = vmatprep.subr.mxu0 0.0
  %732 = vmatpush1.msra.mxu0 0.0
  %733 = vmatprep.subr.mxu0 0.0
  %734 = vmatpush1.msra.mxu0 0.0
  %735 = vmatprep.subr.mxu0 0.0
  %736 = vmatpush1.msra.mxu0 0.0
  %737 = vmatprep.mubr.f32.mxu0 0.0
  %v738 = vand.u32 %v45, 4294901760
  %v739 = vsub.f32 %v45, %v738
  %v740 = vand.u32 %v739, 4294901760
  %741 = vmatmul.mubr.f32.gmra.mrb[0].mxu0 %v740
  %v742 = vpop.f32.mrb[0].mxu0
  %v743 = vadd.f32 %v563, %v742
  %v744 = vpop.f32.mrb[0].mxu0
  %745 = vmatprep.mubr.f32.mxu0 0.0
  %v746 = vand.u32 %v48, 4294901760
  %v747 = vsub.f32 %v48, %v746
  %v748 = vand.u32 %v747, 4294901760
  %749 = vmatmul.mubr.f32.gmra.mrb[0].mxu0 %v748
  %v750 = vpop.f32.mrb[0].mxu0
  %v751 = vadd.f32 %v570, %v750
  %v752 = vpop.f32.mrb[0].mxu0
  %753 = vmatprep.mubr.f32.mxu0 0.0
  %v754 = vand.u32 %v51, 4294901760
  %v755 = vsub.f32 %v51, %v754
  %v756 = vand.u32 %v755, 4294901760
  %757 = vmatmul.mubr.f32.gmra.mrb[0].mxu0 %v756
  %v758 = vpop.f32.mrb[0].mxu0
  %v759 = vadd.f32 %v577, %v758
  %v760 = vpop.f32.mrb[0].mxu0
  %761 = vmatprep.mubr.f32.mxu0 0.0
  %v762 = vand.u32 %v54, 4294901760
  %v763 = vsub.f32 %v54, %v762
  %v764 = vand.u32 %v763, 4294901760
  %765 = vmatmul.mubr.f32.gmra.mrb[0].mxu0 %v764
  %v766 = vpop.f32.mrb[0].mxu0
  %v767 = vadd.f32 %v584, %v766
  %v768 = vpop.f32.mrb[0].mxu0
  %769 = vmatprep.mubr.f32.mxu0 0.0
  %v770 = vand.u32 %v57, 4294901760
  %v771 = vsub.f32 %v57, %v770
  %v772 = vand.u32 %v771, 4294901760
  %773 = vmatmul.mubr.f32.gmra.mrb[0].mxu0 %v772
  %v774 = vpop.f32.mrb[0].mxu0
  %v775 = vadd.f32 %v591, %v774
  %v776 = vpop.f32.mrb[0].mxu0
  %777 = vmatprep.mubr.f32.mxu0 0.0
  %v778 = vand.u32 %v60, 4294901760
  %v779 = vsub.f32 %v60, %v778
  %v780 = vand.u32 %v779, 4294901760
  %781 = vmatmul.mubr.f32.gmra.mrb[0].mxu0 %v780
  %v782 = vpop.f32.mrb[0].mxu0
  %v783 = vadd.f32 %v598, %v782
  %v784 = vpop.f32.mrb[0].mxu0
  %785 = vmatprep.mubr.f32.mxu0 0.0
  %v786 = vand.u32 %v63, 4294901760
  %v787 = vsub.f32 %v63, %v786
  %v788 = vand.u32 %v787, 4294901760
  %789 = vmatmul.mubr.f32.gmra.mrb[0].mxu0 %v788
  %v790 = vpop.f32.mrb[0].mxu0
  %v791 = vadd.f32 %v605, %v790
  %v792 = vpop.f32.mrb[0].mxu0
  %793 = vmatprep.mubr.f32.mxu0 0.0
  %v794 = vand.u32 %v66, 4294901760
  %v795 = vsub.f32 %v66, %v794
  %v796 = vand.u32 %v795, 4294901760
  %797 = vmatmul.mubr.f32.gmra.mrb[0].mxu0 %v796
  %v798 = vpop.f32.mrb[0].mxu0
  %v799 = vadd.f32 %v612, %v798
  %v800 = vpop.f32.mrb[0].mxu0
  %801 = vmatprep.mubr.f32.mxu0 0.0
  %v802 = vand.u32 %v69, 4294901760
  %v803 = vsub.f32 %v69, %v802
  %v804 = vand.u32 %v803, 4294901760
  %805 = vmatmul.mubr.f32.gmra.mrb[0].mxu0 %v804
  %v806 = vpop.f32.mrb[0].mxu0
  %v807 = vadd.f32 %v619, %v806
  %v808 = vpop.f32.mrb[0].mxu0
  %809 = vmatprep.mubr.f32.mxu0 0.0
  %v810 = vand.u32 %v72, 4294901760
  %v811 = vsub.f32 %v72, %v810
  %v812 = vand.u32 %v811, 4294901760
  %813 = vmatmul.mubr.f32.gmra.mrb[0].mxu0 %v812
  %v814 = vpop.f32.mrb[0].mxu0
  %v815 = vadd.f32 %v626, %v814
  %v816 = vpop.f32.mrb[0].mxu0
  %817 = vmatprep.mubr.f32.mxu0 0.0
  %v818 = vand.u32 %v75, 4294901760
  %v819 = vsub.f32 %v75, %v818
  %v820 = vand.u32 %v819, 4294901760
  %821 = vmatmul.mubr.f32.gmra.mrb[0].mxu0 %v820
  %v822 = vpop.f32.mrb[0].mxu0
  %v823 = vadd.f32 %v633, %v822
  %v824 = vpop.f32.mrb[0].mxu0
  %825 = vmatprep.mubr.f32.mxu0 0.0
  %v826 = vand.u32 %v78, 4294901760
  %v827 = vsub.f32 %v78, %v826
  %v828 = vand.u32 %v827, 4294901760
  %829 = vmatmul.mubr.f32.gmra.mrb[0].mxu0 %v828
  %v830 = vpop.f32.mrb[0].mxu0
  %v831 = vadd.f32 %v640, %v830
  %v832 = vpop.f32.mrb[0].mxu0
  %833 = vmatprep.mubr.f32.mxu0 0.0
  %v834 = vand.u32 %v81, 4294901760
  %v835 = vsub.f32 %v81, %v834
  %v836 = vand.u32 %v835, 4294901760
  %837 = vmatmul.mubr.f32.gmra.mrb[0].mxu0 %v836
  %v838 = vpop.f32.mrb[0].mxu0
  %v839 = vadd.f32 %v647, %v838
  %v840 = vpop.f32.mrb[0].mxu0
  %841 = vmatprep.mubr.f32.mxu0 0.0
  %v842 = vand.u32 %v84, 4294901760
  %v843 = vsub.f32 %v84, %v842
  %v844 = vand.u32 %v843, 4294901760
  %845 = vmatmul.mubr.f32.gmra.mrb[0].mxu0 %v844
  %v846 = vpop.f32.mrb[0].mxu0
  %v847 = vadd.f32 %v654, %v846
  %v848 = vpop.f32.mrb[0].mxu0
  %849 = vmatprep.mubr.f32.mxu0 0.0
  %v850 = vand.u32 %v87, 4294901760
  %v851 = vsub.f32 %v87, %v850
  %v852 = vand.u32 %v851, 4294901760
  %853 = vmatmul.mubr.f32.gmra.mrb[0].mxu0 %v852
  %v854 = vpop.f32.mrb[0].mxu0
  %v855 = vadd.f32 %v661, %v854
  %v856 = vpop.f32.mrb[0].mxu0
  %857 = vmatprep.mubr.f32.mxu0 0.0
  %v858 = vand.u32 %v90, 4294901760
  %v859 = vsub.f32 %v90, %v858
  %v860 = vand.u32 %v859, 4294901760
  %861 = vmatmul.mubr.f32.gmra.mrb[0].mxu0 %v860
  %v862 = vpop.f32.mrb[0].mxu0
  %v863 = vadd.f32 %v668, %v862
  %v864 = vpop.f32.mrb[0].mxu0
  %865 = vdwg.mxu0
  %866 = vmatprep.subr.mxu0 0.0
  %v867 = vand.u32 %v41, 4294901760
  %v868 = vsub.f32 %v41, %v867
  %v869 = vand.u32 %v868, 4294901760
  %870 = vmatpush1.msra.mxu0 %v869
  %871 = vmatprep.subr.mxu0 0.0
  %v872 = vand.u32 %v42, 4294901760
  %v873 = vsub.f32 %v42, %v872
  %v874 = vand.u32 %v873, 4294901760
  %875 = vmatpush1.msra.mxu0 %v874
  %876 = vmatprep.subr.mxu0 0.0
  %877 = vmatpush1.msra.mxu0 0.0
  %878 = vmatprep.subr.mxu0 0.0
  %879 = vmatpush1.msra.mxu0 0.0
  %880 = vmatprep.subr.mxu0 0.0
  %881 = vmatpush1.msra.mxu0 0.0
  %882 = vmatprep.subr.mxu0 0.0
  %883 = vmatpush1.msra.mxu0 0.0
  %884 = vmatprep.subr.mxu0 0.0
  %885 = vmatpush1.msra.mxu0 0.0
  %886 = vmatprep.subr.mxu0 0.0
  %887 = vmatpush1.msra.mxu0 0.0
  %888 = vmatprep.subr.mxu0 0.0
  %889 = vmatpush1.msra.mxu0 0.0
  %890 = vmatprep.subr.mxu0 0.0
  %891 = vmatpush1.msra.mxu0 0.0
  %892 = vmatprep.subr.mxu0 0.0
  %893 = vmatpush1.msra.mxu0 0.0
  %894 = vmatprep.subr.mxu0 0.0
  %895 = vmatpush1.msra.mxu0 0.0
  %896 = vmatprep.subr.mxu0 0.0
  %897 = vmatpush1.msra.mxu0 0.0
  %898 = vmatprep.subr.mxu0 0.0
  %899 = vmatpush1.msra.mxu0 0.0
  %900 = vmatprep.subr.mxu0 0.0
  %901 = vmatpush1.msra.mxu0 0.0
  %902 = vmatprep.subr.mxu0 0.0
  %903 = vmatpush1.msra.mxu0 0.0
  %904 = vmatprep.subr.mxu0 0.0
  %905 = vmatpush1.msra.mxu0 0.0
  %906 = vmatprep.subr.mxu0 0.0
  %907 = vmatpush1.msra.mxu0 0.0
  %908 = vmatprep.subr.mxu0 0.0
  %909 = vmatpush1.msra.mxu0 0.0
  %910 = vmatprep.subr.mxu0 0.0
  %911 = vmatpush1.msra.mxu0 0.0
  %912 = vmatprep.subr.mxu0 0.0
  %913 = vmatpush1.msra.mxu0 0.0
  %914 = vmatprep.subr.mxu0 0.0
  %915 = vmatpush1.msra.mxu0 0.0
  %916 = vmatprep.subr.mxu0 0.0
  %917 = vmatpush1.msra.mxu0 0.0
  %918 = vmatprep.subr.mxu0 0.0
  %919 = vmatpush1.msra.mxu0 0.0
  %920 = vmatprep.subr.mxu0 0.0
  %921 = vmatpush1.msra.mxu0 0.0
  %922 = vmatprep.subr.mxu0 0.0
  %923 = vmatpush1.msra.mxu0 0.0
  %924 = vmatprep.subr.mxu0 0.0
  %925 = vmatpush1.msra.mxu0 0.0
  %926 = vmatprep.subr.mxu0 0.0
  %927 = vmatpush1.msra.mxu0 0.0
  %928 = vmatprep.subr.mxu0 0.0
  %929 = vmatpush1.msra.mxu0 0.0
  %930 = vmatprep.subr.mxu0 0.0
  %931 = vmatpush1.msra.mxu0 0.0
  %932 = vmatprep.subr.mxu0 0.0
  %933 = vmatpush1.msra.mxu0 0.0
  %934 = vmatprep.subr.mxu0 0.0
  %935 = vmatpush1.msra.mxu0 0.0
  %936 = vmatprep.mubr.f32.mxu0 0.0
  %v937 = vand.u32 %v45, 4294901760
  %938 = vmatmul.mubr.f32.gmra.mrb[0].mxu0 %v937
  %v939 = vpop.f32.mrb[0].mxu0
  %v940 = vadd.f32 %v743, %v939
  %v941 = vpop.f32.mrb[0].mxu0
  %942 = vmatprep.mubr.f32.mxu0 0.0
  %v943 = vand.u32 %v48, 4294901760
  %944 = vmatmul.mubr.f32.gmra.mrb[0].mxu0 %v943
  %v945 = vpop.f32.mrb[0].mxu0
  %v946 = vadd.f32 %v751, %v945
  %v947 = vpop.f32.mrb[0].mxu0
  %948 = vmatprep.mubr.f32.mxu0 0.0
  %v949 = vand.u32 %v51, 4294901760
  %950 = vmatmul.mubr.f32.gmra.mrb[0].mxu0 %v949
  %v951 = vpop.f32.mrb[0].mxu0
  %v952 = vadd.f32 %v759, %v951
  %v953 = vpop.f32.mrb[0].mxu0
  %954 = vmatprep.mubr.f32.mxu0 0.0
  %v955 = vand.u32 %v54, 4294901760
  %956 = vmatmul.mubr.f32.gmra.mrb[0].mxu0 %v955
  %v957 = vpop.f32.mrb[0].mxu0
  %v958 = vadd.f32 %v767, %v957
  %v959 = vpop.f32.mrb[0].mxu0
  %960 = vmatprep.mubr.f32.mxu0 0.0
  %v961 = vand.u32 %v57, 4294901760
  %962 = vmatmul.mubr.f32.gmra.mrb[0].mxu0 %v961
  %v963 = vpop.f32.mrb[0].mxu0
  %v964 = vadd.f32 %v775, %v963
  %v965 = vpop.f32.mrb[0].mxu0
  %966 = vmatprep.mubr.f32.mxu0 0.0
  %v967 = vand.u32 %v60, 4294901760
  %968 = vmatmul.mubr.f32.gmra.mrb[0].mxu0 %v967
  %v969 = vpop.f32.mrb[0].mxu0
  %v970 = vadd.f32 %v783, %v969
  %v971 = vpop.f32.mrb[0].mxu0
  %972 = vmatprep.mubr.f32.mxu0 0.0
  %v973 = vand.u32 %v63, 4294901760
  %974 = vmatmul.mubr.f32.gmra.mrb[0].mxu0 %v973
  %v975 = vpop.f32.mrb[0].mxu0
  %v976 = vadd.f32 %v791, %v975
  %v977 = vpop.f32.mrb[0].mxu0
  %978 = vmatprep.mubr.f32.mxu0 0.0
  %v979 = vand.u32 %v66, 4294901760
  %980 = vmatmul.mubr.f32.gmra.mrb[0].mxu0 %v979
  %v981 = vpop.f32.mrb[0].mxu0
  %v982 = vadd.f32 %v799, %v981
  %v983 = vpop.f32.mrb[0].mxu0
  %984 = vmatprep.mubr.f32.mxu0 0.0
  %v985 = vand.u32 %v69, 4294901760
  %986 = vmatmul.mubr.f32.gmra.mrb[0].mxu0 %v985
  %v987 = vpop.f32.mrb[0].mxu0
  %v988 = vadd.f32 %v807, %v987
  %v989 = vpop.f32.mrb[0].mxu0
  %990 = vmatprep.mubr.f32.mxu0 0.0
  %v991 = vand.u32 %v72, 4294901760
  %992 = vmatmul.mubr.f32.gmra.mrb[0].mxu0 %v991
  %v993 = vpop.f32.mrb[0].mxu0
  %v994 = vadd.f32 %v815, %v993
  %v995 = vpop.f32.mrb[0].mxu0
  %996 = vmatprep.mubr.f32.mxu0 0.0
  %v997 = vand.u32 %v75, 4294901760
  %998 = vmatmul.mubr.f32.gmra.mrb[0].mxu0 %v997
  %v999 = vpop.f32.mrb[0].mxu0
  %v1000 = vadd.f32 %v823, %v999
  %v1001 = vpop.f32.mrb[0].mxu0
  %1002 = vmatprep.mubr.f32.mxu0 0.0
  %v1003 = vand.u32 %v78, 4294901760
  %1004 = vmatmul.mubr.f32.gmra.mrb[0].mxu0 %v1003
  %v1005 = vpop.f32.mrb[0].mxu0
  %v1006 = vadd.f32 %v831, %v1005
  %v1007 = vpop.f32.mrb[0].mxu0
  %1008 = vmatprep.mubr.f32.mxu0 0.0
  %v1009 = vand.u32 %v81, 4294901760
  %1010 = vmatmul.mubr.f32.gmra.mrb[0].mxu0 %v1009
  %v1011 = vpop.f32.mrb[0].mxu0
  %v1012 = vadd.f32 %v839, %v1011
  %v1013 = vpop.f32.mrb[0].mxu0
  %1014 = vmatprep.mubr.f32.mxu0 0.0
  %v1015 = vand.u32 %v84, 4294901760
  %1016 = vmatmul.mubr.f32.gmra.mrb[0].mxu0 %v1015
  %v1017 = vpop.f32.mrb[0].mxu0
  %v1018 = vadd.f32 %v847, %v1017
  %v1019 = vpop.f32.mrb[0].mxu0
  %1020 = vmatprep.mubr.f32.mxu0 0.0
  %v1021 = vand.u32 %v87, 4294901760
  %1022 = vmatmul.mubr.f32.gmra.mrb[0].mxu0 %v1021
  %v1023 = vpop.f32.mrb[0].mxu0
  %v1024 = vadd.f32 %v855, %v1023
  %v1025 = vpop.f32.mrb[0].mxu0
  %1026 = vmatprep.mubr.f32.mxu0 0.0
  %v1027 = vand.u32 %v90, 4294901760
  %1028 = vmatmul.mubr.f32.gmra.mrb[0].mxu0 %v1027
  %v1029 = vpop.f32.mrb[0].mxu0
  %v1030 = vadd.f32 %v863, %v1029
  %v1031 = vpop.f32.mrb[0].mxu0
  %1032 = vdwg.mxu0
  %1033 = vmatprep.subr.mxu0 0.0
  %v1034 = vand.u32 %v41, 4294901760
  %1035 = vmatpush1.msra.mxu0 %v1034
  %1036 = vmatprep.subr.mxu0 0.0
  %v1037 = vand.u32 %v42, 4294901760
  %1038 = vmatpush1.msra.mxu0 %v1037
  %1039 = vmatprep.subr.mxu0 0.0
  %1040 = vmatpush1.msra.mxu0 0.0
  %1041 = vmatprep.subr.mxu0 0.0
  %1042 = vmatpush1.msra.mxu0 0.0
  %1043 = vmatprep.subr.mxu0 0.0
  %1044 = vmatpush1.msra.mxu0 0.0
  %1045 = vmatprep.subr.mxu0 0.0
  %1046 = vmatpush1.msra.mxu0 0.0
  %1047 = vmatprep.subr.mxu0 0.0
  %1048 = vmatpush1.msra.mxu0 0.0
  %1049 = vmatprep.subr.mxu0 0.0
  %1050 = vmatpush1.msra.mxu0 0.0
  %1051 = vmatprep.subr.mxu0 0.0
  %1052 = vmatpush1.msra.mxu0 0.0
  %1053 = vmatprep.subr.mxu0 0.0
  %1054 = vmatpush1.msra.mxu0 0.0
  %1055 = vmatprep.subr.mxu0 0.0
  %1056 = vmatpush1.msra.mxu0 0.0
  %1057 = vmatprep.subr.mxu0 0.0
  %1058 = vmatpush1.msra.mxu0 0.0
  %1059 = vmatprep.subr.mxu0 0.0
  %1060 = vmatpush1.msra.mxu0 0.0
  %1061 = vmatprep.subr.mxu0 0.0
  %1062 = vmatpush1.msra.mxu0 0.0
  %1063 = vmatprep.subr.mxu0 0.0
  %1064 = vmatpush1.msra.mxu0 0.0
  %1065 = vmatprep.subr.mxu0 0.0
  %1066 = vmatpush1.msra.mxu0 0.0
  %1067 = vmatprep.subr.mxu0 0.0
  %1068 = vmatpush1.msra.mxu0 0.0
  %1069 = vmatprep.subr.mxu0 0.0
  %1070 = vmatpush1.msra.mxu0 0.0
  %1071 = vmatprep.subr.mxu0 0.0
  %1072 = vmatpush1.msra.mxu0 0.0
  %1073 = vmatprep.subr.mxu0 0.0
  %1074 = vmatpush1.msra.mxu0 0.0
  %1075 = vmatprep.subr.mxu0 0.0
  %1076 = vmatpush1.msra.mxu0 0.0
  %1077 = vmatprep.subr.mxu0 0.0
  %1078 = vmatpush1.msra.mxu0 0.0
  %1079 = vmatprep.subr.mxu0 0.0
  %1080 = vmatpush1.msra.mxu0 0.0
  %1081 = vmatprep.subr.mxu0 0.0
  %1082 = vmatpush1.msra.mxu0 0.0
  %1083 = vmatprep.subr.mxu0 0.0
  %1084 = vmatpush1.msra.mxu0 0.0
  %1085 = vmatprep.subr.mxu0 0.0
  %1086 = vmatpush1.msra.mxu0 0.0
  %1087 = vmatprep.subr.mxu0 0.0
  %1088 = vmatpush1.msra.mxu0 0.0
  %1089 = vmatprep.subr.mxu0 0.0
  %1090 = vmatpush1.msra.mxu0 0.0
  %1091 = vmatprep.subr.mxu0 0.0
  %1092 = vmatpush1.msra.mxu0 0.0
  %1093 = vmatprep.subr.mxu0 0.0
  %1094 = vmatpush1.msra.mxu0 0.0
  %1095 = vmatprep.subr.mxu0 0.0
  %1096 = vmatpush1.msra.mxu0 0.0
  %1097 = vmatprep.subr.mxu0 0.0
  %1098 = vmatpush1.msra.mxu0 0.0
  %1099 = vmatprep.mubr.f32.mxu0 0.0
  %v1100 = vand.u32 %v45, 4294901760
  %1101 = vmatmul.mubr.f32.gmra.mrb[0].mxu0 %v1100
  %v1102 = vpop.f32.mrb[0].mxu0
  %v1103 = vadd.f32 %v940, %v1102
  %v1104 = vpop.f32.mrb[0].mxu0
  %1105 = vmatprep.mubr.f32.mxu0 0.0
  %v1106 = vand.u32 %v48, 4294901760
  %1107 = vmatmul.mubr.f32.gmra.mrb[0].mxu0 %v1106
  %v1108 = vpop.f32.mrb[0].mxu0
  %v1109 = vadd.f32 %v946, %v1108
  %v1110 = vpop.f32.mrb[0].mxu0
  %1111 = vmatprep.mubr.f32.mxu0 0.0
  %v1112 = vand.u32 %v51, 4294901760
  %1113 = vmatmul.mubr.f32.gmra.mrb[0].mxu0 %v1112
  %v1114 = vpop.f32.mrb[0].mxu0
  %v1115 = vadd.f32 %v952, %v1114
  %v1116 = vpop.f32.mrb[0].mxu0
  %1117 = vmatprep.mubr.f32.mxu0 0.0
  %v1118 = vand.u32 %v54, 4294901760
  %1119 = vmatmul.mubr.f32.gmra.mrb[0].mxu0 %v1118
  %v1120 = vpop.f32.mrb[0].mxu0
  %v1121 = vadd.f32 %v958, %v1120
  %v1122 = vpop.f32.mrb[0].mxu0
  %1123 = vmatprep.mubr.f32.mxu0 0.0
  %v1124 = vand.u32 %v57, 4294901760
  %1125 = vmatmul.mubr.f32.gmra.mrb[0].mxu0 %v1124
  %v1126 = vpop.f32.mrb[0].mxu0
  %v1127 = vadd.f32 %v964, %v1126
  %v1128 = vpop.f32.mrb[0].mxu0
  %1129 = vmatprep.mubr.f32.mxu0 0.0
  %v1130 = vand.u32 %v60, 4294901760
  %1131 = vmatmul.mubr.f32.gmra.mrb[0].mxu0 %v1130
  %v1132 = vpop.f32.mrb[0].mxu0
  %v1133 = vadd.f32 %v970, %v1132
  %v1134 = vpop.f32.mrb[0].mxu0
  %1135 = vmatprep.mubr.f32.mxu0 0.0
  %v1136 = vand.u32 %v63, 4294901760
  %1137 = vmatmul.mubr.f32.gmra.mrb[0].mxu0 %v1136
  %v1138 = vpop.f32.mrb[0].mxu0
  %v1139 = vadd.f32 %v976, %v1138
  %v1140 = vpop.f32.mrb[0].mxu0
  %1141 = vmatprep.mubr.f32.mxu0 0.0
  %v1142 = vand.u32 %v66, 4294901760
  %1143 = vmatmul.mubr.f32.gmra.mrb[0].mxu0 %v1142
  %v1144 = vpop.f32.mrb[0].mxu0
  %v1145 = vadd.f32 %v982, %v1144
  %v1146 = vpop.f32.mrb[0].mxu0
  %1147 = vmatprep.mubr.f32.mxu0 0.0
  %v1148 = vand.u32 %v69, 4294901760
  %1149 = vmatmul.mubr.f32.gmra.mrb[0].mxu0 %v1148
  %v1150 = vpop.f32.mrb[0].mxu0
  %v1151 = vadd.f32 %v988, %v1150
  %v1152 = vpop.f32.mrb[0].mxu0
  %1153 = vmatprep.mubr.f32.mxu0 0.0
  %v1154 = vand.u32 %v72, 4294901760
  %1155 = vmatmul.mubr.f32.gmra.mrb[0].mxu0 %v1154
  %v1156 = vpop.f32.mrb[0].mxu0
  %v1157 = vadd.f32 %v994, %v1156
  %v1158 = vpop.f32.mrb[0].mxu0
  %1159 = vmatprep.mubr.f32.mxu0 0.0
  %v1160 = vand.u32 %v75, 4294901760
  %1161 = vmatmul.mubr.f32.gmra.mrb[0].mxu0 %v1160
  %v1162 = vpop.f32.mrb[0].mxu0
  %v1163 = vadd.f32 %v1000, %v1162
  %v1164 = vpop.f32.mrb[0].mxu0
  %1165 = vmatprep.mubr.f32.mxu0 0.0
  %v1166 = vand.u32 %v78, 4294901760
  %1167 = vmatmul.mubr.f32.gmra.mrb[0].mxu0 %v1166
  %v1168 = vpop.f32.mrb[0].mxu0
  %v1169 = vadd.f32 %v1006, %v1168
  %v1170 = vpop.f32.mrb[0].mxu0
  %1171 = vmatprep.mubr.f32.mxu0 0.0
  %v1172 = vand.u32 %v81, 4294901760
  %1173 = vmatmul.mubr.f32.gmra.mrb[0].mxu0 %v1172
  %v1174 = vpop.f32.mrb[0].mxu0
  %v1175 = vadd.f32 %v1012, %v1174
  %v1176 = vpop.f32.mrb[0].mxu0
  %1177 = vmatprep.mubr.f32.mxu0 0.0
  %v1178 = vand.u32 %v84, 4294901760
  %1179 = vmatmul.mubr.f32.gmra.mrb[0].mxu0 %v1178
  %v1180 = vpop.f32.mrb[0].mxu0
  %v1181 = vadd.f32 %v1018, %v1180
  %v1182 = vpop.f32.mrb[0].mxu0
  %1183 = vmatprep.mubr.f32.mxu0 0.0
  %v1184 = vand.u32 %v87, 4294901760
  %1185 = vmatmul.mubr.f32.gmra.mrb[0].mxu0 %v1184
  %v1186 = vpop.f32.mrb[0].mxu0
  %v1187 = vadd.f32 %v1024, %v1186
  %v1188 = vpop.f32.mrb[0].mxu0
  %1189 = vmatprep.mubr.f32.mxu0 0.0
  %v1190 = vand.u32 %v90, 4294901760
  %1191 = vmatmul.mubr.f32.gmra.mrb[0].mxu0 %v1190
  %v1192 = vpop.f32.mrb[0].mxu0
  %v1193 = vadd.f32 %v1030, %v1192
  %v1194 = vpop.f32.mrb[0].mxu0
  %1195 = vdwg.mxu0
  %vm1196 = vcmask 261120
  %1197 = vst.msk [vmem:[%s1] sm:$0xff] %vm1196, %v1103
  %1198 = vst.msk [vmem:[%s1 + $0x8] sm:$0xff] %vm1196, %v1109
  %1199 = vst.msk [vmem:[%s1 + $0x10] sm:$0xff] %vm1196, %v1115
  %1200 = vst.msk [vmem:[%s1 + $0x18] sm:$0xff] %vm1196, %v1121
  %1201 = vst.msk [vmem:[%s1 + $0x20] sm:$0xff] %vm1196, %v1127
  %1202 = vst.msk [vmem:[%s1 + $0x28] sm:$0xff] %vm1196, %v1133
  %1203 = vst.msk [vmem:[%s1 + $0x30] sm:$0xff] %vm1196, %v1139
  %1204 = vst.msk [vmem:[%s1 + $0x38] sm:$0xff] %vm1196, %v1145
  %1205 = vst.msk [vmem:[%s1 + $0x40] sm:$0xff] %vm1196, %v1151
  %1206 = vst.msk [vmem:[%s1 + $0x48] sm:$0xff] %vm1196, %v1157
  %1207 = vst.msk [vmem:[%s1 + $0x50] sm:$0xff] %vm1196, %v1163
  %1208 = vst.msk [vmem:[%s1 + $0x58] sm:$0xff] %vm1196, %v1169
  %1209 = vst.msk [vmem:[%s1 + $0x60] sm:$0xff] %vm1196, %v1175
  %1210 = vst.msk [vmem:[%s1 + $0x68] sm:$0xff] %vm1196, %v1181
  %1211 = vst.msk [vmem:[%s1 + $0x70] sm:$0xff] %vm1196, %v1187
  %1212 = vst.msk [vmem:[%s1 + $0x78] sm:$0xff] %vm1196, %v1193
  %1229 = vrot.lane.b32.xlu0 %v1103, 32
  %v1230 = vpop.permute.xlu0 %1229
  %1231 = vrot.lane.b32.xlu0 %v1109, 32
  %v1232 = vpop.permute.xlu0 %1231
  %1233 = vrot.lane.b32.xlu0 %v1115, 32
  %v1234 = vpop.permute.xlu0 %1233
  %1235 = vrot.lane.b32.xlu0 %v1121, 32
  %v1236 = vpop.permute.xlu0 %1235
  %1237 = vrot.lane.b32.xlu0 %v1127, 32
  %v1238 = vpop.permute.xlu0 %1237
  %1239 = vrot.lane.b32.xlu0 %v1133, 32
  %v1240 = vpop.permute.xlu0 %1239
  %1241 = vrot.lane.b32.xlu0 %v1139, 32
  %v1242 = vpop.permute.xlu0 %1241
  %1243 = vrot.lane.b32.xlu0 %v1145, 32
  %v1244 = vpop.permute.xlu0 %1243
  %1245 = vrot.lane.b32.xlu0 %v1151, 32
  %v1246 = vpop.permute.xlu0 %1245
  %1247 = vrot.lane.b32.xlu0 %v1157, 32
  %v1248 = vpop.permute.xlu0 %1247
  %1249 = vrot.lane.b32.xlu0 %v1163, 32
  %v1250 = vpop.permute.xlu0 %1249
  %1251 = vrot.lane.b32.xlu0 %v1169, 32
  %v1252 = vpop.permute.xlu0 %1251
  %1253 = vrot.lane.b32.xlu0 %v1175, 32
  %v1254 = vpop.permute.xlu0 %1253
  %1255 = vrot.lane.b32.xlu0 %v1181, 32
  %v1256 = vpop.permute.xlu0 %1255
  %1257 = vrot.lane.b32.xlu0 %v1187, 32
  %v1258 = vpop.permute.xlu0 %1257
  %1259 = vrot.lane.b32.xlu0 %v1193, 32
  %v1260 = vpop.permute.xlu0 %1259
  %vm1277 = vcmask 523520
  %1278 = vst.msk [vmem:[%s1] sm:$0xff] %vm1277, %v1230
  %1279 = vst.msk [vmem:[%s1 + $0x8] sm:$0xff] %vm1277, %v1232
  %1280 = vst.msk [vmem:[%s1 + $0x10] sm:$0xff] %vm1277, %v1234
  %1281 = vst.msk [vmem:[%s1 + $0x18] sm:$0xff] %vm1277, %v1236
  %1282 = vst.msk [vmem:[%s1 + $0x20] sm:$0xff] %vm1277, %v1238
  %1283 = vst.msk [vmem:[%s1 + $0x28] sm:$0xff] %vm1277, %v1240
  %1284 = vst.msk [vmem:[%s1 + $0x30] sm:$0xff] %vm1277, %v1242
  %1285 = vst.msk [vmem:[%s1 + $0x38] sm:$0xff] %vm1277, %v1244
  %1286 = vst.msk [vmem:[%s1 + $0x40] sm:$0xff] %vm1277, %v1246
  %1287 = vst.msk [vmem:[%s1 + $0x48] sm:$0xff] %vm1277, %v1248
  %1288 = vst.msk [vmem:[%s1 + $0x50] sm:$0xff] %vm1277, %v1250
  %1289 = vst.msk [vmem:[%s1 + $0x58] sm:$0xff] %vm1277, %v1252
  %1290 = vst.msk [vmem:[%s1 + $0x60] sm:$0xff] %vm1277, %v1254
  %1291 = vst.msk [vmem:[%s1 + $0x68] sm:$0xff] %vm1277, %v1256
  %1292 = vst.msk [vmem:[%s1 + $0x70] sm:$0xff] %vm1277, %v1258
  %1293 = vst.msk [vmem:[%s1 + $0x78] sm:$0xff] %vm1277, %v1260
  %1294 = vrot.lane.b32.xlu0 %v1103, 64
  %v1295 = vpop.permute.xlu0 %1294
  %1296 = vrot.lane.b32.xlu0 %v1109, 64
  %v1297 = vpop.permute.xlu0 %1296
  %1298 = vrot.lane.b32.xlu0 %v1115, 64
  %v1299 = vpop.permute.xlu0 %1298
  %1300 = vrot.lane.b32.xlu0 %v1121, 64
  %v1301 = vpop.permute.xlu0 %1300
  %1302 = vrot.lane.b32.xlu0 %v1127, 64
  %v1303 = vpop.permute.xlu0 %1302
  %1304 = vrot.lane.b32.xlu0 %v1133, 64
  %v1305 = vpop.permute.xlu0 %1304
  %1306 = vrot.lane.b32.xlu0 %v1139, 64
  %v1307 = vpop.permute.xlu0 %1306
  %1308 = vrot.lane.b32.xlu0 %v1145, 64
  %v1309 = vpop.permute.xlu0 %1308
  %1310 = vrot.lane.b32.xlu0 %v1151, 64
  %v1311 = vpop.permute.xlu0 %1310
  %1312 = vrot.lane.b32.xlu0 %v1157, 64
  %v1313 = vpop.permute.xlu0 %1312
  %1314 = vrot.lane.b32.xlu0 %v1163, 64
  %v1315 = vpop.permute.xlu0 %1314
  %1316 = vrot.lane.b32.xlu0 %v1169, 64
  %v1317 = vpop.permute.xlu0 %1316
  %1318 = vrot.lane.b32.xlu0 %v1175, 64
  %v1319 = vpop.permute.xlu0 %1318
  %1320 = vrot.lane.b32.xlu0 %v1181, 64
  %v1321 = vpop.permute.xlu0 %1320
  %1322 = vrot.lane.b32.xlu0 %v1187, 64
  %v1323 = vpop.permute.xlu0 %1322
  %1324 = vrot.lane.b32.xlu0 %v1193, 64
  %v1325 = vpop.permute.xlu0 %1324
  %vm1342 = vcmask 785920
  %1343 = vst.msk [vmem:[%s1] sm:$0xff] %vm1342, %v1295
  %1344 = vst.msk [vmem:[%s1 + $0x8] sm:$0xff] %vm1342, %v1297
  %1345 = vst.msk [vmem:[%s1 + $0x10] sm:$0xff] %vm1342, %v1299
  %1346 = vst.msk [vmem:[%s1 + $0x18] sm:$0xff] %vm1342, %v1301
  %1347 = vst.msk [vmem:[%s1 + $0x20] sm:$0xff] %vm1342, %v1303
  %1348 = vst.msk [vmem:[%s1 + $0x28] sm:$0xff] %vm1342, %v1305
  %1349 = vst.msk [vmem:[%s1 + $0x30] sm:$0xff] %vm1342, %v1307
  %1350 = vst.msk [vmem:[%s1 + $0x38] sm:$0xff] %vm1342, %v1309
  %1351 = vst.msk [vmem:[%s1 + $0x40] sm:$0xff] %vm1342, %v1311
  %1352 = vst.msk [vmem:[%s1 + $0x48] sm:$0xff] %vm1342, %v1313
  %1353 = vst.msk [vmem:[%s1 + $0x50] sm:$0xff] %vm1342, %v1315
  %1354 = vst.msk [vmem:[%s1 + $0x58] sm:$0xff] %vm1342, %v1317
  %1355 = vst.msk [vmem:[%s1 + $0x60] sm:$0xff] %vm1342, %v1319
  %1356 = vst.msk [vmem:[%s1 + $0x68] sm:$0xff] %vm1342, %v1321
  %1357 = vst.msk [vmem:[%s1 + $0x70] sm:$0xff] %vm1342, %v1323
  %1358 = vst.msk [vmem:[%s1 + $0x78] sm:$0xff] %vm1342, %v1325
  // Predicated region
  $region6: #{tpu_custom_call.1} parent=0 // pred_check
    _
  $region7: #{tpu_custom_call.1} parent=0 // pred_check_branch
    %1360 = sbr.rel (0) target = $region9
  $region8: #{tpu_custom_call.1} parent=0 // pred_region
    _
  $region9: #{tpu_custom_call.1} parent=0 // pred_fallthru
    _
  // Predicated region
  $region10: #{tpu_custom_call.1} parent=0 // pred_check
    _
  $region11: #{tpu_custom_call.1} parent=0 // pred_check_branch
    %1362 = sbr.rel (0) target = $region13
  $region12: #{tpu_custom_call.1} parent=0 // pred_region
    _
  $region13: #{tpu_custom_call.1} parent=0 // pred_fallthru
    _

</llo_original>
